<compile_context>
chip_gen: v7x
topology: tpu7x:2x2x1
jax: 0.10.0
libtpu: 0.0.40
codegen_flags: <defaults>
</compile_context>

<pallas_src>
import math

import jax
import jax.numpy as jnp
from jax.experimental import pallas as pl
from jax.experimental.pallas import tpu as pltpu


def value_net_kernel(x_ref, w1_ref, b1_ref, w2_ref, b2_ref,
                     w3_ref, b3_ref, w4_ref, b4_ref, o_ref):
    """Fused MLP on one (TB, 8) batch tile. Weights are VMEM-resident."""
    x = x_ref[...]
    h = jnp.dot(x, w1_ref[...], preferred_element_type=jnp.float32) + b1_ref[...]
    h = jnp.maximum(h, 0.0)
    h = jnp.dot(h, w2_ref[...], preferred_element_type=jnp.float32) + b2_ref[...]
    h = jnp.maximum(h, 0.0)
    h = jnp.dot(h, w3_ref[...], preferred_element_type=jnp.float32) + b3_ref[...]
    h = jnp.maximum(h, 0.0)
    # Final 128 -> 1 layer on VPU (+ XLU lane reduce) instead of the MXU:
    # w4_ref is the transposed weight row, shape (1, 128); b4_ref is (1, 1).
    out = jnp.sum(h * w4_ref[...], axis=-1, keepdims=True) + b4_ref[...]
    o_ref[...] = out.astype(o_ref.dtype)


def _round_up(a, m):
    return (a + m - 1) // m * m


def _pick_tile(B, max_tile=512):
    """Pick a sublane-aligned batch tile <= max_tile minimizing padding waste."""
    n_tiles = pl.cdiv(B, max_tile)
    tb = _round_up(pl.cdiv(B, n_tiles), 8)
    return tb, n_tiles * tb


def value_net_forward(x, params, max_tile=512):
    """x: (B, 8) float32; params: dict of (in,out) weights and (1,out) biases.

    Returns (B, 1) float32, identical semantics to the PyTorch Value_Net.
    """
    B = x.shape[0]

    TB, B_pad = _pick_tile(B, max_tile)
    if B_pad != B:
        x = jnp.pad(x, ((0, B_pad - B), (0, 0)))
    n_tiles = B_pad // TB

    w1, b1 = params["w1"], params["b1"]
    w2, b2 = params["w2"], params["b2"]
    w3, b3 = params["w3"], params["b3"]
    w4_row = params["w4"].reshape(1, -1)   # (1, 128) for VPU broadcast-multiply
    b4 = params["b4"].reshape(1, 1)        # (1, 1)

    weights = (w1, b1, w2, b2, w3, b3, w4_row, b4)

    # Constant block index -> fetched once, VMEM-resident across all grid steps.
    def resident(shape):
        return pl.BlockSpec(shape, lambda i: (0, 0))

    flops_per_row = 2 * (8 * 128 + 128 * 64 + 64 * 128 + 128 * 1)
    param_bytes = sum(int(p.size) * p.dtype.itemsize for p in weights)
    cost = pl.CostEstimate(
        flops=B_pad * flops_per_row,
        transcendentals=0,
        bytes_accessed=B_pad * (8 + 1) * 4 + param_bytes,
    )

    out = pl.pallas_call(
        value_net_kernel,
        out_shape=jax.ShapeDtypeStruct((B_pad, 1), jnp.float32),
        grid=(n_tiles,),
        in_specs=[
            pl.BlockSpec((TB, 8), lambda i: (i, 0)),     # x: tiled over batch
            resident(w1.shape), resident(b1.shape),
            resident(w2.shape), resident(b2.shape),
            resident(w3.shape), resident(b3.shape),
            resident(w4_row.shape), resident(b4.shape),
        ],
        out_specs=pl.BlockSpec((TB, 1), lambda i: (i, 0)),
        compiler_params=pltpu.CompilerParams(
            dimension_semantics=("parallel",),           # v7x: shard batch on 2 TCs
        ),
        cost_estimate=cost,
    )(x, *weights)

    return out[:B]


def init_params(key):
    """Deterministic init mimicking torch.nn.Linear default (U(+/- 1/sqrt(fan_in))).
    Weights stored as (in, out) = transpose of PyTorch's (out, in)."""
    dims = [(8, 128), (128, 64), (64, 128), (128, 1)]
    params = {}
    keys = jax.random.split(key, 2 * len(dims))
    for i, (fan_in, fan_out) in enumerate(dims):
        bound = 1.0 / math.sqrt(fan_in)
        params[f"w{i+1}"] = jax.random.uniform(
            keys[2 * i], (fan_in, fan_out), jnp.float32, -bound, bound)
        params[f"b{i+1}"] = jax.random.uniform(
            keys[2 * i + 1], (1, fan_out), jnp.float32, -bound, bound)
    return params


def value_net_ref(x, params):
    h = jnp.maximum(x @ params["w1"] + params["b1"], 0.0)
    h = jnp.maximum(h @ params["w2"] + params["b2"], 0.0)
    h = jnp.maximum(h @ params["w3"] + params["b3"], 0.0)
    return h @ params["w4"] + params["b4"]


if __name__ == "__main__":
    key = jax.random.PRNGKey(0)
    k_param, k_x, k_x2 = jax.random.split(key, 3)
    params = init_params(k_param)

    # Small primary test (B=8, state dim 8 per the module).
    B = 8
    x = jax.random.normal(k_x, (B, 8), jnp.float32)
    out = jax.block_until_ready(value_net_forward(x, params))
    ref = value_net_ref(x, params)
    assert out.shape == (B, 1), out.shape
    assert jnp.allclose(out, ref, atol=1e-5, rtol=1e-5), "mismatch vs reference (B=8)"

    # Non-multiple batch to exercise wrapper-side padding + tiled path.
    B2 = 37
    x2 = jax.random.normal(k_x2, (B2, 8), jnp.float32)
    out2 = jax.block_until_ready(value_net_forward(x2, params))
    ref2 = value_net_ref(x2, params)
    assert out2.shape == (B2, 1), out2.shape
    assert jnp.allclose(out2, ref2, atol=1e-5, rtol=1e-5), "mismatch vs reference (B=37)"

    print("KERNEL_OK")
</pallas_src>

<mosaic_0001>
module attributes {stable_mosaic.version = 11 : i64} {
  func.func @value_net_kernel(%arg0: i32, %arg1: memref<8x8xf32, #tpu.memory_space<vmem>>, %arg2: memref<8x128xf32, #tpu.memory_space<vmem>>, %arg3: memref<1x128xf32, #tpu.memory_space<vmem>>, %arg4: memref<128x64xf32, #tpu.memory_space<vmem>>, %arg5: memref<1x64xf32, #tpu.memory_space<vmem>>, %arg6: memref<64x128xf32, #tpu.memory_space<vmem>>, %arg7: memref<1x128xf32, #tpu.memory_space<vmem>>, %arg8: memref<1x128xf32, #tpu.memory_space<vmem>>, %arg9: memref<1x1xf32, #tpu.memory_space<vmem>>, %arg10: memref<8x1xf32, #tpu.memory_space<vmem>>) attributes {dimension_semantics = [#tpu.dimension_semantics<parallel>], iteration_bounds = array<i64: 1>, scalar_prefetch = 0 : i64, scratch_operands = 0 : i64, tpu.core_type = #tpu.core_type<tc>, window_params = [{transform_indices = @transform_0, window_bounds = array<i64: 8, 8>}, {pipeline_mode = #tpu.pipeline_mode<synchronous>, transform_indices = @transform_1, window_bounds = array<i64: 8, 128>}, {pipeline_mode = #tpu.pipeline_mode<synchronous>, transform_indices = @transform_2, window_bounds = array<i64: 1, 128>}, {pipeline_mode = #tpu.pipeline_mode<synchronous>, transform_indices = @transform_3, window_bounds = array<i64: 128, 64>}, {pipeline_mode = #tpu.pipeline_mode<synchronous>, transform_indices = @transform_4, window_bounds = array<i64: 1, 64>}, {pipeline_mode = #tpu.pipeline_mode<synchronous>, transform_indices = @transform_5, window_bounds = array<i64: 64, 128>}, {pipeline_mode = #tpu.pipeline_mode<synchronous>, transform_indices = @transform_6, window_bounds = array<i64: 1, 128>}, {pipeline_mode = #tpu.pipeline_mode<synchronous>, transform_indices = @transform_7, window_bounds = array<i64: 1, 128>}, {pipeline_mode = #tpu.pipeline_mode<synchronous>, transform_indices = @transform_8, window_bounds = array<i64: 1, 1>}, {transform_indices = @transform_9, window_bounds = array<i64: 8, 1>}]} {
    %c0 = arith.constant 0 : index
    %c0_0 = arith.constant 0 : index
    %0 = vector.load %arg1[%c0, %c0_0] : memref<8x8xf32, #tpu.memory_space<vmem>>, vector<8x8xf32>
    %c0_1 = arith.constant 0 : index
    %c0_2 = arith.constant 0 : index
    %1 = vector.load %arg2[%c0_1, %c0_2] : memref<8x128xf32, #tpu.memory_space<vmem>>, vector<8x128xf32>
    %cst = arith.constant dense<0.000000e+00> : vector<8x128xf32>
    %2 = tpu.matmul %0, %1, %cst {dimension_numbers = #tpu.dot_dimension_numbers<[1], [0], [0], [1], [0, 0, 1, 1], [], []>} : vector<8x8xf32>, vector<8x128xf32>, vector<8x128xf32> -> vector<8x128xf32>
    %c0_3 = arith.constant 0 : index
    %c0_4 = arith.constant 0 : index
    %3 = vector.load %arg3[%c0_3, %c0_4] : memref<1x128xf32, #tpu.memory_space<vmem>>, vector<1x128xf32>
    %4 = vector.broadcast %3 : vector<1x128xf32> to vector<8x128xf32>
    %5 = arith.addf %2, %4 : vector<8x128xf32>
    %cst_5 = arith.constant 0.000000e+00 : f32
    %6 = vector.broadcast %cst_5 : f32 to vector<8x128xf32>
    %7 = arith.maximumf %5, %6 : vector<8x128xf32>
    %c0_6 = arith.constant 0 : index
    %c0_7 = arith.constant 0 : index
    %8 = vector.load %arg4[%c0_6, %c0_7] : memref<128x64xf32, #tpu.memory_space<vmem>>, vector<128x64xf32>
    %cst_8 = arith.constant dense<0.000000e+00> : vector<8x64xf32>
    %9 = tpu.matmul %7, %8, %cst_8 {dimension_numbers = #tpu.dot_dimension_numbers<[1], [0], [0], [1], [0, 0, 1, 1], [], []>} : vector<8x128xf32>, vector<128x64xf32>, vector<8x64xf32> -> vector<8x64xf32>
    %c0_9 = arith.constant 0 : index
    %c0_10 = arith.constant 0 : index
    %10 = vector.load %arg5[%c0_9, %c0_10] : memref<1x64xf32, #tpu.memory_space<vmem>>, vector<1x64xf32>
    %11 = vector.broadcast %10 : vector<1x64xf32> to vector<8x64xf32>
    %12 = arith.addf %9, %11 : vector<8x64xf32>
    %cst_11 = arith.constant 0.000000e+00 : f32
    %13 = vector.broadcast %cst_11 : f32 to vector<8x64xf32>
    %14 = arith.maximumf %12, %13 : vector<8x64xf32>
    %c0_12 = arith.constant 0 : index
    %c0_13 = arith.constant 0 : index
    %15 = vector.load %arg6[%c0_12, %c0_13] : memref<64x128xf32, #tpu.memory_space<vmem>>, vector<64x128xf32>
    %cst_14 = arith.constant dense<0.000000e+00> : vector<8x128xf32>
    %16 = tpu.matmul %14, %15, %cst_14 {dimension_numbers = #tpu.dot_dimension_numbers<[1], [0], [0], [1], [0, 0, 1, 1], [], []>} : vector<8x64xf32>, vector<64x128xf32>, vector<8x128xf32> -> vector<8x128xf32>
    %c0_15 = arith.constant 0 : index
    %c0_16 = arith.constant 0 : index
    %17 = vector.load %arg7[%c0_15, %c0_16] : memref<1x128xf32, #tpu.memory_space<vmem>>, vector<1x128xf32>
    %18 = vector.broadcast %17 : vector<1x128xf32> to vector<8x128xf32>
    %19 = arith.addf %16, %18 : vector<8x128xf32>
    %cst_17 = arith.constant 0.000000e+00 : f32
    %20 = vector.broadcast %cst_17 : f32 to vector<8x128xf32>
    %21 = arith.maximumf %19, %20 : vector<8x128xf32>
    %c0_18 = arith.constant 0 : index
    %c0_19 = arith.constant 0 : index
    %22 = vector.load %arg8[%c0_18, %c0_19] : memref<1x128xf32, #tpu.memory_space<vmem>>, vector<1x128xf32>
    %23 = vector.broadcast %22 : vector<1x128xf32> to vector<8x128xf32>
    %24 = arith.mulf %21, %23 : vector<8x128xf32>
    %cst_20 = arith.constant dense<0.000000e+00> : vector<8xf32>
    %25 = vector.multi_reduction <add>, %24, %cst_20 [1] : vector<8x128xf32> to vector<8xf32>
    %26 = vector.shape_cast %25 : vector<8xf32> to vector<8x1xf32>
    %c0_21 = arith.constant 0 : index
    %c0_22 = arith.constant 0 : index
    %27 = vector.load %arg9[%c0_21, %c0_22] : memref<1x1xf32, #tpu.memory_space<vmem>>, vector<1x1xf32>
    %28 = vector.broadcast %27 : vector<1x1xf32> to vector<8x1xf32>
    %29 = arith.addf %26, %28 : vector<8x1xf32>
    %c0_23 = arith.constant 0 : index
    %c0_24 = arith.constant 0 : index
    %30 = vector.load %arg10[%c0_23, %c0_24] : memref<8x1xf32, #tpu.memory_space<vmem>>, vector<8x1xf32>
    tpu.vector_store %arg10[%c0_23, %c0_24], %29 {strides = array<i32>} : memref<8x1xf32, #tpu.memory_space<vmem>>, vector<8x1xf32>,
    return
  }
  func.func @transform_0(%arg0: i32) -> (i32, i32) {
    %c0_i32 = arith.constant 0 : i32
    %c0_i32_0 = arith.constant 0 : i32
    return %arg0, %c0_i32 : i32, i32
  }
  func.func @transform_1(%arg0: i32) -> (i32, i32) {
    %c0_i32 = arith.constant 0 : i32
    %c0_i32_0 = arith.constant 0 : i32
    %c0_i32_1 = arith.constant 0 : i32
    return %c0_i32, %c0_i32_0 : i32, i32
  }
  func.func @transform_2(%arg0: i32) -> (i32, i32) {
    %c0_i32 = arith.constant 0 : i32
    %c0_i32_0 = arith.constant 0 : i32
    %c0_i32_1 = arith.constant 0 : i32
    return %c0_i32, %c0_i32_0 : i32, i32
  }
  func.func @transform_3(%arg0: i32) -> (i32, i32) {
    %c0_i32 = arith.constant 0 : i32
    %c0_i32_0 = arith.constant 0 : i32
    %c0_i32_1 = arith.constant 0 : i32
    return %c0_i32, %c0_i32_0 : i32, i32
  }
  func.func @transform_4(%arg0: i32) -> (i32, i32) {
    %c0_i32 = arith.constant 0 : i32
    %c0_i32_0 = arith.constant 0 : i32
    %c0_i32_1 = arith.constant 0 : i32
    return %c0_i32, %c0_i32_0 : i32, i32
  }
  func.func @transform_5(%arg0: i32) -> (i32, i32) {
    %c0_i32 = arith.constant 0 : i32
    %c0_i32_0 = arith.constant 0 : i32
    %c0_i32_1 = arith.constant 0 : i32
    return %c0_i32, %c0_i32_0 : i32, i32
  }
  func.func @transform_6(%arg0: i32) -> (i32, i32) {
    %c0_i32 = arith.constant 0 : i32
    %c0_i32_0 = arith.constant 0 : i32
    %c0_i32_1 = arith.constant 0 : i32
    return %c0_i32, %c0_i32_0 : i32, i32
  }
  func.func @transform_7(%arg0: i32) -> (i32, i32) {
    %c0_i32 = arith.constant 0 : i32
    %c0_i32_0 = arith.constant 0 : i32
    %c0_i32_1 = arith.constant 0 : i32
    return %c0_i32, %c0_i32_0 : i32, i32
  }
  func.func @transform_8(%arg0: i32) -> (i32, i32) {
    %c0_i32 = arith.constant 0 : i32
    %c0_i32_0 = arith.constant 0 : i32
    %c0_i32_1 = arith.constant 0 : i32
    return %c0_i32, %c0_i32_0 : i32, i32
  }
  func.func @transform_9(%arg0: i32) -> (i32, i32) {
    %c0_i32 = arith.constant 0 : i32
    %c0_i32_0 = arith.constant 0 : i32
    return %arg0, %c0_i32 : i32, i32
  }
}

</mosaic_0001>

<llo_original>
// kernel: tpu_custom_call.1
$region0: #{tpu_custom_call.1}
  #allocation0 [shape = 'u32[]', space=smem, size = 0x4, offset = 0x4, fixed_abs, tag = 'smem constant byte address 0x4 - core index']
  #allocation1 [shape = 'u32[144,128]{1,0:T(1,128)}', space=vmem, size = 0x12000, scoped, tag = 'internal scratch']
  #allocation2 [shape = 'f32[1,1]{1,0:T(1,128)S(1)}', space=vmem, size = 0x200, scoped, tag = 'scoped memory for tpu_custom_call.1']
  %s0 = inlined_call_operand.vmem [shape: f32[8,8], index: 0, kind: input, shape index: {}]
  %s1 = inlined_call_operand.vmem [shape: f32[8,128], index: 1, kind: input, shape index: {}]
  %s2 = inlined_call_operand.vmem [shape: f32[1,128], index: 2, kind: input, shape index: {}]
  %s3 = inlined_call_operand.vmem [shape: f32[128,64], index: 3, kind: input, shape index: {}]
  %s4 = inlined_call_operand.vmem [shape: f32[1,64], index: 4, kind: input, shape index: {}]
  %s5 = inlined_call_operand.vmem [shape: f32[64,128], index: 5, kind: input, shape index: {}]
  %s6 = inlined_call_operand.vmem [shape: f32[1,128], index: 6, kind: input, shape index: {}]
  %s7 = inlined_call_operand.vmem [shape: f32[1,128], index: 7, kind: input, shape index: {}]
  %s8 = inlined_call_operand.<no memory space> [shape: f32[1,1], index: 8, kind: input, shape index: {}]
  %s9 = inlined_call_operand.vmem [shape: f32[8,1], index: 9, kind: output, shape index: {}]
  %s10 = sld [smem:[#allocation0]]
  $region46: #{tpu_custom_call.1} parent=0
    _
  %s12 = ssub.s32 1, %s10
  %s13 = scalar_select 0, %s12, %s10
  %v14 = vstv %s8
  %15 = vst [vmem:[#allocation2] sm:$0x1] %v14
  // Predicated region
  $region2: #{tpu_custom_call.1} parent=0 // pred_check
    _
  $region3: #{tpu_custom_call.1} parent=0 // pred_check_branch
    %17 = sbr.rel (0) target = $region5
  $region4: #{tpu_custom_call.1} parent=0 // pred_region
    _
  $region5: #{tpu_custom_call.1} parent=0 // pred_fallthru
    _
  // Predicated region
  $region6: #{tpu_custom_call.1} parent=0 // pred_check
    _
  $region7: #{tpu_custom_call.1} parent=0 // pred_check_branch
    %19 = sbr.rel (0) target = $region9
  $region8: #{tpu_custom_call.1} parent=0 // pred_region
    _
  $region9: #{tpu_custom_call.1} parent=0 // pred_fallthru
    _
  // Predicated region
  $region10: #{tpu_custom_call.1} parent=0 // pred_check
    _
  $region11: #{tpu_custom_call.1} parent=0 // pred_check_branch
    %21 = sbr.rel (0) target = $region13
  $region12: #{tpu_custom_call.1} parent=0 // pred_region
    _
  $region13: #{tpu_custom_call.1} parent=0 // pred_fallthru
    _
  // Predicated region
  $region14: #{tpu_custom_call.1} parent=0 // pred_check
    _
  $region15: #{tpu_custom_call.1} parent=0 // pred_check_branch
    %23 = sbr.rel (0) target = $region17
  $region16: #{tpu_custom_call.1} parent=0 // pred_region
    _
  $region17: #{tpu_custom_call.1} parent=0 // pred_fallthru
    _
  // Predicated region
  $region18: #{tpu_custom_call.1} parent=0 // pred_check
    _
  $region19: #{tpu_custom_call.1} parent=0 // pred_check_branch
    %25 = sbr.rel (0) target = $region21
  $region20: #{tpu_custom_call.1} parent=0 // pred_region
    _
  $region21: #{tpu_custom_call.1} parent=0 // pred_fallthru
    _
  // Predicated region
  $region22: #{tpu_custom_call.1} parent=0 // pred_check
    _
  $region23: #{tpu_custom_call.1} parent=0 // pred_check_branch
    %27 = sbr.rel (0) target = $region25
  $region24: #{tpu_custom_call.1} parent=0 // pred_region
    _
  $region25: #{tpu_custom_call.1} parent=0 // pred_fallthru
    _
  // Predicated region
  $region26: #{tpu_custom_call.1} parent=0 // pred_check
    _
  $region27: #{tpu_custom_call.1} parent=0 // pred_check_branch
    %29 = sbr.rel (0) target = $region29
  $region28: #{tpu_custom_call.1} parent=0 // pred_region
    _
  $region29: #{tpu_custom_call.1} parent=0 // pred_fallthru
    _
  // Predicated region
  $region30: #{tpu_custom_call.1} parent=0 // pred_check
    _
  $region31: #{tpu_custom_call.1} parent=0 // pred_check_branch
    %31 = sbr.rel (0) target = $region33
  $region32: #{tpu_custom_call.1} parent=0 // pred_region
    _
  $region33: #{tpu_custom_call.1} parent=0 // pred_fallthru
    _
  // Predicated region
  $region34: #{tpu_custom_call.1} parent=0 // pred_check
    _
  $region35: #{tpu_custom_call.1} parent=0 // pred_check_branch
    %33 = sbr.rel (0) target = $region37
  $region36: #{tpu_custom_call.1} parent=0 // pred_region
    _
  $region37: #{tpu_custom_call.1} parent=0 // pred_fallthru
    _
  %v34 = vld [vmem:[%s0] sm:$0xff]
  %v35 = vld [vmem:[%s1] sm:$0xff]
  %v36 = vld [vmem:[%s2] sm:$0x1]
  %v38 = vlaneseq
  %v39 = vshrl.u32 %v38, 7
  %v40 = vsub.s32 0, %v39
  %v41 = vrot.slane %v36, %v40
  %vm43 = vcmask 64512
  %v45 = vsel %vm43, %v34, 0
  %47 = vmatprep.subr.mxu0 0.0
  %48 = vmatpush1.msra.mxu0 %v35
  %49 = vmatprep.subr.mxu0 0.0
  %50 = vmatpush1.msra.mxu0 0.0
  %51 = vmatprep.subr.mxu0 0.0
  %52 = vmatpush1.msra.mxu0 0.0
  %53 = vmatprep.subr.mxu0 0.0
  %54 = vmatpush1.msra.mxu0 0.0
  %55 = vmatprep.subr.mxu0 0.0
  %56 = vmatpush1.msra.mxu0 0.0
  %57 = vmatprep.subr.mxu0 0.0
  %58 = vmatpush1.msra.mxu0 0.0
  %59 = vmatprep.subr.mxu0 0.0
  %60 = vmatpush1.msra.mxu0 0.0
  %61 = vmatprep.subr.mxu0 0.0
  %62 = vmatpush1.msra.mxu0 0.0
  %63 = vmatprep.subr.mxu0 0.0
  %64 = vmatpush1.msra.mxu0 0.0
  %65 = vmatprep.subr.mxu0 0.0
  %66 = vmatpush1.msra.mxu0 0.0
  %67 = vmatprep.subr.mxu0 0.0
  %68 = vmatpush1.msra.mxu0 0.0
  %69 = vmatprep.subr.mxu0 0.0
  %70 = vmatpush1.msra.mxu0 0.0
  %71 = vmatprep.subr.mxu0 0.0
  %72 = vmatpush1.msra.mxu0 0.0
  %73 = vmatprep.subr.mxu0 0.0
  %74 = vmatpush1.msra.mxu0 0.0
  %75 = vmatprep.subr.mxu0 0.0
  %76 = vmatpush1.msra.mxu0 0.0
  %77 = vmatprep.subr.mxu0 0.0
  %78 = vmatpush1.msra.mxu0 0.0
  %79 = vmatprep.subr.mxu0 0.0
  %80 = vmatpush1.msra.mxu0 0.0
  %81 = vmatprep.subr.mxu0 0.0
  %82 = vmatpush1.msra.mxu0 0.0
  %83 = vmatprep.subr.mxu0 0.0
  %84 = vmatpush1.msra.mxu0 0.0
  %85 = vmatprep.subr.mxu0 0.0
  %86 = vmatpush1.msra.mxu0 0.0
  %87 = vmatprep.subr.mxu0 0.0
  %88 = vmatpush1.msra.mxu0 0.0
  %89 = vmatprep.subr.mxu0 0.0
  %90 = vmatpush1.msra.mxu0 0.0
  %91 = vmatprep.subr.mxu0 0.0
  %92 = vmatpush1.msra.mxu0 0.0
  %93 = vmatprep.subr.mxu0 0.0
  %94 = vmatpush1.msra.mxu0 0.0
  %95 = vmatprep.subr.mxu0 0.0
  %96 = vmatpush1.msra.mxu0 0.0
  %97 = vmatprep.subr.mxu0 0.0
  %98 = vmatpush1.msra.mxu0 0.0
  %99 = vmatprep.subr.mxu0 0.0
  %100 = vmatpush1.msra.mxu0 0.0
  %101 = vmatprep.subr.mxu0 0.0
  %102 = vmatpush1.msra.mxu0 0.0
  %103 = vmatprep.subr.mxu0 0.0
  %104 = vmatpush1.msra.mxu0 0.0
  %105 = vmatprep.subr.mxu0 0.0
  %106 = vmatpush1.msra.mxu0 0.0
  %107 = vmatprep.subr.mxu0 0.0
  %108 = vmatpush1.msra.mxu0 0.0
  %109 = vmatprep.subr.mxu0 0.0
  %110 = vmatpush1.msra.mxu0 0.0
  %111 = vmatprep.mubr.f32.mxu0 0.0
  %112 = vmatmul.mubr.f32.gmra.mrb[0].mxu0 %v45
  %v113 = vpop.f32.mrb[0].mxu0
  %v114 = vadd.f32 %v41, %v113
  %v115 = vpop.f32.mrb[0].mxu0
  %116 = vdwg.mxu0
  %v117 = vmax.f32 %v114, 0.0
  %v118 = vld [vmem:[%s3] sm:$0xff]
  %v119 = vld [vmem:[%s3 + $0x8] sm:$0xff]
  %v120 = vld [vmem:[%s3 + $0x10] sm:$0xff]
  %v121 = vld [vmem:[%s3 + $0x18] sm:$0xff]
  %v122 = vld [vmem:[%s3 + $0x20] sm:$0xff]
  %v123 = vld [vmem:[%s3 + $0x28] sm:$0xff]
  %v124 = vld [vmem:[%s3 + $0x30] sm:$0xff]
  %v125 = vld [vmem:[%s3 + $0x38] sm:$0xff]
  %v126 = vld [vmem:[%s3 + $0x40] sm:$0xff]
  %v127 = vld [vmem:[%s3 + $0x48] sm:$0xff]
  %v128 = vld [vmem:[%s3 + $0x50] sm:$0xff]
  %v129 = vld [vmem:[%s3 + $0x58] sm:$0xff]
  %v130 = vld [vmem:[%s3 + $0x60] sm:$0xff]
  %v131 = vld [vmem:[%s3 + $0x68] sm:$0xff]
  %v132 = vld [vmem:[%s3 + $0x70] sm:$0xff]
  %v133 = vld [vmem:[%s3 + $0x78] sm:$0xff]
  %v134 = vld [vmem:[%s4] sm:$0x1]
  %v136 = vlaneseq
  %v137 = vshrl.u32 %v136, 7
  %v138 = vsub.s32 0, %v137
  %v139 = vrot.slane %v134, %v138
  %141 = vmatprep.subr.mxu0 0.0
  %142 = vmatpush1.msra.mxu0 %v118
  %143 = vmatprep.subr.mxu0 0.0
  %144 = vmatpush1.msra.mxu0 %v119
  %145 = vmatprep.subr.mxu0 0.0
  %146 = vmatpush1.msra.mxu0 %v120
  %147 = vmatprep.subr.mxu0 0.0
  %148 = vmatpush1.msra.mxu0 %v121
  %149 = vmatprep.subr.mxu0 0.0
  %150 = vmatpush1.msra.mxu0 %v122
  %151 = vmatprep.subr.mxu0 0.0
  %152 = vmatpush1.msra.mxu0 %v123
  %153 = vmatprep.subr.mxu0 0.0
  %154 = vmatpush1.msra.mxu0 %v124
  %155 = vmatprep.subr.mxu0 0.0
  %156 = vmatpush1.msra.mxu0 %v125
  %157 = vmatprep.subr.mxu0 0.0
  %158 = vmatpush1.msra.mxu0 %v126
  %159 = vmatprep.subr.mxu0 0.0
  %160 = vmatpush1.msra.mxu0 %v127
  %161 = vmatprep.subr.mxu0 0.0
  %162 = vmatpush1.msra.mxu0 %v128
  %163 = vmatprep.subr.mxu0 0.0
  %164 = vmatpush1.msra.mxu0 %v129
  %165 = vmatprep.subr.mxu0 0.0
  %166 = vmatpush1.msra.mxu0 %v130
  %167 = vmatprep.subr.mxu0 0.0
  %168 = vmatpush1.msra.mxu0 %v131
  %169 = vmatprep.subr.mxu0 0.0
  %170 = vmatpush1.msra.mxu0 %v132
  %171 = vmatprep.subr.mxu0 0.0
  %172 = vmatpush1.msra.mxu0 %v133
  %173 = vmatprep.subr.mxu0 0.0
  %174 = vmatpush1.msra.mxu0 0.0
  %175 = vmatprep.subr.mxu0 0.0
  %176 = vmatpush1.msra.mxu0 0.0
  %177 = vmatprep.subr.mxu0 0.0
  %178 = vmatpush1.msra.mxu0 0.0
  %179 = vmatprep.subr.mxu0 0.0
  %180 = vmatpush1.msra.mxu0 0.0
  %181 = vmatprep.subr.mxu0 0.0
  %182 = vmatpush1.msra.mxu0 0.0
  %183 = vmatprep.subr.mxu0 0.0
  %184 = vmatpush1.msra.mxu0 0.0
  %185 = vmatprep.subr.mxu0 0.0
  %186 = vmatpush1.msra.mxu0 0.0
  %187 = vmatprep.subr.mxu0 0.0
  %188 = vmatpush1.msra.mxu0 0.0
  %189 = vmatprep.subr.mxu0 0.0
  %190 = vmatpush1.msra.mxu0 0.0
  %191 = vmatprep.subr.mxu0 0.0
  %192 = vmatpush1.msra.mxu0 0.0
  %193 = vmatprep.subr.mxu0 0.0
  %194 = vmatpush1.msra.mxu0 0.0
  %195 = vmatprep.subr.mxu0 0.0
  %196 = vmatpush1.msra.mxu0 0.0
  %197 = vmatprep.subr.mxu0 0.0
  %198 = vmatpush1.msra.mxu0 0.0
  %199 = vmatprep.subr.mxu0 0.0
  %200 = vmatpush1.msra.mxu0 0.0
  %201 = vmatprep.subr.mxu0 0.0
  %202 = vmatpush1.msra.mxu0 0.0
  %203 = vmatprep.subr.mxu0 0.0
  %204 = vmatpush1.msra.mxu0 0.0
  %205 = vmatprep.mubr.f32.mxu0 0.0
  %206 = vmatmul.mubr.f32.gmra.mrb[0].mxu0 %v117
  %v207 = vpop.f32.mrb[0].mxu0
  %v208 = vadd.f32 %v139, %v207
  %v209 = vpop.f32.mrb[0].mxu0
  %210 = vdwg.mxu0
  %v211 = vmax.f32 %v208, 0.0
  %v212 = vld [vmem:[%s5] sm:$0xff]
  %v213 = vld [vmem:[%s5 + $0x8] sm:$0xff]
  %v214 = vld [vmem:[%s5 + $0x10] sm:$0xff]
  %v215 = vld [vmem:[%s5 + $0x18] sm:$0xff]
  %v216 = vld [vmem:[%s5 + $0x20] sm:$0xff]
  %v217 = vld [vmem:[%s5 + $0x28] sm:$0xff]
  %v218 = vld [vmem:[%s5 + $0x30] sm:$0xff]
  %v219 = vld [vmem:[%s5 + $0x38] sm:$0xff]
  %v220 = vld [vmem:[%s6] sm:$0x1]
  %v222 = vlaneseq
  %v223 = vshrl.u32 %v222, 7
  %v224 = vsub.s32 0, %v223
  %v225 = vrot.slane %v220, %v224
  %vm227 = vcmask 523264
  %v229 = vsel %vm227, %v211, 0
  %231 = vmatprep.subr.mxu0 0.0
  %232 = vmatpush1.msra.mxu0 %v212
  %233 = vmatprep.subr.mxu0 0.0
  %234 = vmatpush1.msra.mxu0 %v213
  %235 = vmatprep.subr.mxu0 0.0
  %236 = vmatpush1.msra.mxu0 %v214
  %237 = vmatprep.subr.mxu0 0.0
  %238 = vmatpush1.msra.mxu0 %v215
  %239 = vmatprep.subr.mxu0 0.0
  %240 = vmatpush1.msra.mxu0 %v216
  %241 = vmatprep.subr.mxu0 0.0
  %242 = vmatpush1.msra.mxu0 %v217
  %243 = vmatprep.subr.mxu0 0.0
  %244 = vmatpush1.msra.mxu0 %v218
  %245 = vmatprep.subr.mxu0 0.0
  %246 = vmatpush1.msra.mxu0 %v219
  %247 = vmatprep.subr.mxu0 0.0
  %248 = vmatpush1.msra.mxu0 0.0
  %249 = vmatprep.subr.mxu0 0.0
  %250 = vmatpush1.msra.mxu0 0.0
  %251 = vmatprep.subr.mxu0 0.0
  %252 = vmatpush1.msra.mxu0 0.0
  %253 = vmatprep.subr.mxu0 0.0
  %254 = vmatpush1.msra.mxu0 0.0
  %255 = vmatprep.subr.mxu0 0.0
  %256 = vmatpush1.msra.mxu0 0.0
  %257 = vmatprep.subr.mxu0 0.0
  %258 = vmatpush1.msra.mxu0 0.0
  %259 = vmatprep.subr.mxu0 0.0
  %260 = vmatpush1.msra.mxu0 0.0
  %261 = vmatprep.subr.mxu0 0.0
  %262 = vmatpush1.msra.mxu0 0.0
  %263 = vmatprep.subr.mxu0 0.0
  %264 = vmatpush1.msra.mxu0 0.0
  %265 = vmatprep.subr.mxu0 0.0
  %266 = vmatpush1.msra.mxu0 0.0
  %267 = vmatprep.subr.mxu0 0.0
  %268 = vmatpush1.msra.mxu0 0.0
  %269 = vmatprep.subr.mxu0 0.0
  %270 = vmatpush1.msra.mxu0 0.0
  %271 = vmatprep.subr.mxu0 0.0
  %272 = vmatpush1.msra.mxu0 0.0
  %273 = vmatprep.subr.mxu0 0.0
  %274 = vmatpush1.msra.mxu0 0.0
  %275 = vmatprep.subr.mxu0 0.0
  %276 = vmatpush1.msra.mxu0 0.0
  %277 = vmatprep.subr.mxu0 0.0
  %278 = vmatpush1.msra.mxu0 0.0
  %279 = vmatprep.subr.mxu0 0.0
  %280 = vmatpush1.msra.mxu0 0.0
  %281 = vmatprep.subr.mxu0 0.0
  %282 = vmatpush1.msra.mxu0 0.0
  %283 = vmatprep.subr.mxu0 0.0
  %284 = vmatpush1.msra.mxu0 0.0
  %285 = vmatprep.subr.mxu0 0.0
  %286 = vmatpush1.msra.mxu0 0.0
  %287 = vmatprep.subr.mxu0 0.0
  %288 = vmatpush1.msra.mxu0 0.0
  %289 = vmatprep.subr.mxu0 0.0
  %290 = vmatpush1.msra.mxu0 0.0
  %291 = vmatprep.subr.mxu0 0.0
  %292 = vmatpush1.msra.mxu0 0.0
  %293 = vmatprep.subr.mxu0 0.0
  %294 = vmatpush1.msra.mxu0 0.0
  %295 = vmatprep.mubr.f32.mxu0 0.0
  %296 = vmatmul.mubr.f32.gmra.mrb[0].mxu0 %v229
  %v297 = vpop.f32.mrb[0].mxu0
  %v298 = vadd.f32 %v225, %v297
  %v299 = vpop.f32.mrb[0].mxu0
  %300 = vdwg.mxu0
  %v301 = vmax.f32 %v298, 0.0
  %v302 = vld [vmem:[%s7] sm:$0x1]
  %v304 = vlaneseq
  %v305 = vshrl.u32 %v304, 7
  %v306 = vsub.s32 0, %v305
  %v307 = vrot.slane %v302, %v306
  %v309 = vmul.f32 %v301, %v307
  %310 = vadd.xlane.f32.xlu0 %v309
  %v311 = vpop.xlane.xlu0 %310
  %v312 = vld [vmem:[#allocation2] sm:$0x1]
  %v314 = vlaneseq
  %v315 = vshrl.u32 %v314, 7
  %v316 = vsub.s32 0, %v315
  %v317 = vrot.slane %v312, %v316
  %v319 = vadd.f32 %v311, %v317
  %vm320 = vcmask 7168
  %321 = vst.msk [vmem:[%s9] sm:$0xff] %vm320, %v319
  // Predicated region
  $region38: #{tpu_custom_call.1} parent=0 // pred_check
    _
  $region39: #{tpu_custom_call.1} parent=0 // pred_check_branch
    %323 = sbr.rel (0) target = $region41
  $region40: #{tpu_custom_call.1} parent=0 // pred_region
    _
  $region41: #{tpu_custom_call.1} parent=0 // pred_fallthru
    _
  // Predicated region
  $region42: #{tpu_custom_call.1} parent=0 // pred_check
    _
  $region43: #{tpu_custom_call.1} parent=0 // pred_check_branch
    %325 = sbr.rel (0) target = $region45
  $region44: #{tpu_custom_call.1} parent=0 // pred_region
    _
  $region45: #{tpu_custom_call.1} parent=0 // pred_fallthru
    _

</llo_original>
